<compile_context>
chip_gen: v7x
topology: tpu7x:2x2x1
jax: 0.10.0
libtpu: 0.0.40
codegen_flags: <defaults>
</compile_context>

<pallas_src>
import functools

import jax
import jax.numpy as jnp
from jax.experimental import pallas as pl
from jax.experimental.pallas import tpu as pltpu

LANE = 128
SUBLANE = 8


def _cdiv(a, b):
    return -(-a // b)


def _stats_kernel(gt_ref, out_ref, acc_ref, *, n_classes, tile_rows, per_core,
                  n_valid):
    # gt_ref / out_ref : (tile_rows, 128) f32 pixel tiles
    # acc_ref          : (1, 4*n_classes, 128) f32 output block, revisited along
    #                    the inner grid axis (per-lane partial accumulators).
    #                    rows [0:C)=count, [C:2C)=sumsq, [2C:3C)=pcount, [3C:4C)=match
    core = pl.program_id(0)
    step = pl.program_id(1)

    @pl.when(step == 0)
    def _():
        acc_ref[...] = jnp.zeros_like(acc_ref)

    # Logical tile index. The index_map clamps the DMA to stay in-bounds; the
    # masking below uses the *unclamped* index, so clamped / duplicated tiles
    # and the padded tail contribute exactly nothing.
    t = core * per_core + step

    gt = gt_ref[...]
    out = out_ref[...]

    row = jax.lax.broadcasted_iota(jnp.int32, (tile_rows, LANE), 0)
    lane = jax.lax.broadcasted_iota(jnp.int32, (tile_rows, LANE), 1)
    gidx = (t * tile_rows + row) * LANE + lane
    valid = gidx < n_valid

    # torch semantics: class index = gt.long() (truncation). Invalid -> -1.
    gt_i = jnp.where(valid, gt.astype(jnp.int32), -1)
    pred = jnp.round(jnp.clip(out, 0.0, float(n_classes - 1)))
    pred_i = jnp.where(valid, pred.astype(jnp.int32), -1)

    diff = gt - out
    diff2 = diff * diff

    one = jnp.float32(1.0)
    zero = jnp.float32(0.0)
    cnt_rows, sq_rows, pcnt_rows, match_rows = [], [], [], []
    # n_classes is small & static; compare once per class, reduce sublanes only.
    # TODO(synk): for n_classes >~ 16 replace this loop with a one-hot MXU
    # contraction to stay HBM-bound.
    for cls in range(n_classes):
        g_is = gt_i == cls
        p_is = pred_i == cls
        cnt_rows.append(jnp.sum(jnp.where(g_is, one, zero), axis=0, keepdims=True))
        sq_rows.append(jnp.sum(jnp.where(g_is, diff2, zero), axis=0, keepdims=True))
        pcnt_rows.append(jnp.sum(jnp.where(p_is, one, zero), axis=0, keepdims=True))
        match_rows.append(jnp.sum(jnp.where(g_is & p_is, one, zero),
                                  axis=0, keepdims=True))

    update = jnp.concatenate(cnt_rows + sq_rows + pcnt_rows + match_rows, axis=0)
    acc_ref[...] += update[None, :, :]


def _per_class_stats(outputs, gt, n_classes, *, tile_rows=2048, n_split=2):
    """One streaming Pallas pass over all pixels -> (4, n_classes) f32 stats."""
    assert outputs.shape == gt.shape
    assert outputs.shape[1] == 1, "channel dim must be 1 (class-index maps)"
    assert tile_rows % SUBLANE == 0

    gt_f = gt.reshape(-1).astype(jnp.float32)
    out_f = outputs.reshape(-1).astype(jnp.float32)
    n = gt_f.shape[0]

    # Minimal tail pad so the stream reshapes to (rows, 128) with rows % 8 == 0.
    # For typical aligned shapes this branch is skipped and the reshape is free.
    align = SUBLANE * LANE
    if n % align:
        pad = align - n % align
        gt_f = jnp.pad(gt_f, (0, pad))
        out_f = jnp.pad(out_f, (0, pad))
    rows = gt_f.shape[0] // LANE
    gt2 = gt_f.reshape(rows, LANE)
    out2 = out_f.reshape(rows, LANE)

    block_rows = min(tile_rows, rows)
    num_tiles = _cdiv(rows, block_rows)
    n_split = max(1, min(n_split, num_tiles))
    per_core = _cdiv(num_tiles, n_split)

    def in_map(c, i):
        # Clamp so the DMA never starts past the array; duplicated tiles are
        # fully masked inside the kernel via the unclamped logical index.
        return (jnp.minimum(c * per_core + i, num_tiles - 1), 0)

    kernel = functools.partial(
        _stats_kernel, n_classes=n_classes, tile_rows=block_rows,
        per_core=per_core, n_valid=n)

    cp_kwargs = dict(dimension_semantics=("parallel", "arbitrary"))
    # 2 inputs x 2 pipeline buffers; default 2048-row tiles use ~4 MiB, well
    # within every generation's default scoped VMEM. Only raise the limit if a
    # caller asks for much bigger blocks (v5e default scoped VMEM is 16 MiB).
    if 4 * block_rows * LANE * 4 > 12 * (1 << 20):
        cp_kwargs["vmem_limit_bytes"] = 32 * (1 << 20)

    acc = pl.pallas_call(
        kernel,
        out_shape=jax.ShapeDtypeStruct((n_split, 4 * n_classes, LANE),
                                       jnp.float32),
        grid_spec=pltpu.PrefetchScalarGridSpec(
            num_scalar_prefetch=0,
            grid=(n_split, per_core),
            in_specs=[
                pl.BlockSpec((block_rows, LANE), in_map),
                pl.BlockSpec((block_rows, LANE), in_map),
            ],
            out_specs=pl.BlockSpec((1, 4 * n_classes, LANE),
                                   lambda c, i: (c, 0, 0)),
        ),
        compiler_params=pltpu.CompilerParams(**cp_kwargs),
    )(gt2, out2)

    # Fold core-split axis and lanes; single cross-lane reduce per class, once.
    return acc.sum(axis=(0, 2)).reshape(4, n_classes)


def mse_dice_loss_pallas(outputs, gt, n_classes, *, smooth=1e-5,
                         compute_weights=False, mask_one_hot=False,
                         tile_rows=2048, n_split=2):
    assert n_classes >= 2
    if mask_one_hot:
        gt = jnp.argmax(gt, axis=1, keepdims=True).astype(outputs.dtype)

    stats = _per_class_stats(outputs, gt, n_classes,
                             tile_rows=tile_rows, n_split=n_split)
    cnt, sumsq, pcnt, match = stats[0], stats[1], stats[2], stats[3]

    # MyMSE: per-class scatter MSE.
    mse = sumsq / jnp.maximum(cnt, smooth)

    # GDiceLossV2(compact_data=False, self_compute_weight=compute_weights) on
    # one_hot(round(clip(outputs, 0, C-1))) vs one_hot(gt).
    if compute_weights:
        w = 1.0 / jnp.maximum(cnt * cnt, smooth)
        intersect = match * w
        denominator = jnp.sum((pcnt + cnt) * w)      # scalar
    else:
        intersect = match
        denominator = pcnt + cnt                     # (C,)
    dice = 1.0 - 2.0 * intersect / jnp.maximum(denominator, smooth)

    return jnp.sum(mse * dice)


def mse_dice_loss_reference(outputs, gt, n_classes, *, smooth=1e-5,
                            compute_weights=False, mask_one_hot=False):
    # Pure-JAX reference mirroring the PyTorch module structure.
    if mask_one_hot:
        gt = jnp.argmax(gt, axis=1, keepdims=True).astype(outputs.dtype)
    gt = gt.astype(jnp.float32)
    outputs = outputs.astype(jnp.float32)

    gt_idx = gt[:, 0].astype(jnp.int32)                      # (B, H, W)
    onehot_gt = jax.nn.one_hot(gt_idx, n_classes, axis=1)    # (B, C, H, W)

    # MyMSE
    gt_sc = onehot_gt * gt
    out_sc = onehot_gt * outputs
    cnt = jnp.maximum(onehot_gt.sum((0, 2, 3)), smooth)
    mse = ((gt_sc - out_sc) ** 2).sum((0, 2, 3)) / cnt

    # GDiceLossV2 on one-hot of rounded outputs
    rounded = jnp.round(jnp.clip(outputs, 0, n_classes - 1))[:, 0].astype(jnp.int32)
    onehot_pred = jax.nn.one_hot(rounded, n_classes, axis=1)

    def flatten_cf(t):
        return jnp.moveaxis(t, 1, 0).reshape(n_classes, -1)

    my_in = flatten_cf(onehot_pred)
    target = flatten_cf(onehot_gt)
    if compute_weights:
        ts = target.sum(-1)
        w = 1.0 / jnp.maximum(ts * ts, smooth)
        intersect = (my_in * target).sum(-1) * w
        denominator = ((my_in + target).sum(-1) * w).sum()
    else:
        intersect = (my_in * target).sum(-1)
        denominator = (my_in + target).sum(-1)
    dice = 1.0 - 2.0 * intersect / jnp.maximum(denominator, smooth)
    return jnp.sum(mse * dice)


if __name__ == "__main__":
    key = jax.random.PRNGKey(0)
    k_gt, k_out = jax.random.split(key)

    B, C, H, W = 2, 4, 16, 16
    # gt: integer class labels stored (as in the PyTorch usage) in a float map
    gt = jax.random.randint(k_gt, (B, 1, H, W), 0, C).astype(jnp.float32)
    outputs = (jax.random.normal(k_out, (B, 1, H, W), dtype=jnp.float32) * 1.5
               + 0.5 * (C - 1))

    for cw in (False, True):
        loss = mse_dice_loss_pallas(outputs, gt, n_classes=C,
                                    compute_weights=cw)
        loss = jax.block_until_ready(loss)
        ref = mse_dice_loss_reference(outputs, gt, n_classes=C,
                                      compute_weights=cw)
        assert loss.shape == ()
        assert jnp.allclose(loss, ref, rtol=1e-4, atol=1e-4), (cw, loss, ref)

    print("KERNEL_OK")
</pallas_src>

<mosaic_0001>
module attributes {stable_mosaic.version = 11 : i64} {
  func.func @_stats_kernel(%arg0: i32, %arg1: i32, %arg2: memref<8x128xf32, #tpu.memory_space<vmem>>, %arg3: memref<8x128xf32, #tpu.memory_space<vmem>>, %arg4: memref<1x16x128xf32, #tpu.memory_space<vmem>>) attributes {dimension_semantics = [#tpu.dimension_semantics<parallel>, #tpu.dimension_semantics<arbitrary>], iteration_bounds = array<i64: 1, 1>, scalar_prefetch = 0 : i64, scratch_operands = 0 : i64, tpu.core_type = #tpu.core_type<tc>, window_params = [{transform_indices = @transform_0, window_bounds = array<i64: 8, 128>}, {transform_indices = @transform_1, window_bounds = array<i64: 8, 128>}, {transform_indices = @transform_2, window_bounds = array<i64: 1, 16, 128>}]} {
    %c0_i32 = arith.constant 0 : i32
    %0 = arith.cmpi eq, %arg1, %c0_i32 : i32
    %1 = arith.extui %0 : i1 to i32
    %c0_i32_0 = arith.constant 0 : i32
    %2 = arith.cmpi ne, %1, %c0_i32_0 : i32
    scf.if %2 {
      %cst_62 = arith.constant 0.000000e+00 : f32
      %131 = vector.broadcast %cst_62 : f32 to vector<1x16x128xf32>
      %c0_63 = arith.constant 0 : index
      %c0_64 = arith.constant 0 : index
      %c0_65 = arith.constant 0 : index
      %132 = vector.load %arg4[%c0_63, %c0_64, %c0_65] : memref<1x16x128xf32, #tpu.memory_space<vmem>>, vector<1x16x128xf32>
      tpu.vector_store %arg4[%c0_63, %c0_64, %c0_65], %131 {strides = array<i32>} : memref<1x16x128xf32, #tpu.memory_space<vmem>>, vector<1x16x128xf32>,
    } else {
    }
    %c1_i32 = arith.constant 1 : i32
    %3 = arith.muli %arg0, %c1_i32 : i32
    %4 = arith.addi %3, %arg1 : i32
    %c0 = arith.constant 0 : index
    %c0_1 = arith.constant 0 : index
    %5 = vector.load %arg2[%c0, %c0_1] : memref<8x128xf32, #tpu.memory_space<vmem>>, vector<8x128xf32>
    %c0_2 = arith.constant 0 : index
    %c0_3 = arith.constant 0 : index
    %6 = vector.load %arg3[%c0_2, %c0_3] : memref<8x128xf32, #tpu.memory_space<vmem>>, vector<8x128xf32>
    %7 = tpu.iota {dimensions = array<i32: 0>} : vector<8x128xi32>
    %8 = tpu.iota {dimensions = array<i32: 1>} : vector<8x128xi32>
    %c8_i32 = arith.constant 8 : i32
    %9 = arith.muli %4, %c8_i32 : i32
    %10 = vector.broadcast %9 : i32 to vector<8x128xi32>
    %11 = arith.addi %10, %7 : vector<8x128xi32>
    %c128_i32 = arith.constant 128 : i32
    %12 = vector.broadcast %c128_i32 : i32 to vector<8x128xi32>
    %13 = arith.muli %11, %12 : vector<8x128xi32>
    %14 = arith.addi %13, %8 : vector<8x128xi32>
    %c512_i32 = arith.constant 512 : i32
    %15 = vector.broadcast %c512_i32 : i32 to vector<8x128xi32>
    %16 = arith.cmpi slt, %14, %15 : vector<8x128xi32>
    %17 = arith.fptosi %5 : vector<8x128xf32> to vector<8x128xi32>
    %c-1_i32 = arith.constant -1 : i32
    %18 = vector.broadcast %c-1_i32 : i32 to vector<8x128xi32>
    %19 = arith.select %16, %17, %18 : vector<8x128xi1>, vector<8x128xi32>
    %cst = arith.constant 0.000000e+00 : f32
    %cst_4 = arith.constant 3.000000e+00 : f32
    %20 = vector.broadcast %cst : f32 to vector<8x128xf32>
    %21 = arith.maximumf %20, %6 : vector<8x128xf32>
    %22 = vector.broadcast %cst_4 : f32 to vector<8x128xf32>
    %23 = arith.minimumf %22, %21 : vector<8x128xf32>
    %24 = math.roundeven %23 : vector<8x128xf32>
    %25 = arith.fptosi %24 : vector<8x128xf32> to vector<8x128xi32>
    %c-1_i32_5 = arith.constant -1 : i32
    %26 = vector.broadcast %c-1_i32_5 : i32 to vector<8x128xi32>
    %27 = arith.select %16, %25, %26 : vector<8x128xi1>, vector<8x128xi32>
    %28 = arith.subf %5, %6 : vector<8x128xf32>
    %29 = arith.mulf %28, %28 : vector<8x128xf32>
    %c0_i32_6 = arith.constant 0 : i32
    %30 = vector.broadcast %c0_i32_6 : i32 to vector<8x128xi32>
    %31 = arith.cmpi eq, %19, %30 : vector<8x128xi32>
    %c0_i32_7 = arith.constant 0 : i32
    %32 = vector.broadcast %c0_i32_7 : i32 to vector<8x128xi32>
    %33 = arith.cmpi eq, %27, %32 : vector<8x128xi32>
    %cst_8 = arith.constant 1.000000e+00 : f32
    %cst_9 = arith.constant 0.000000e+00 : f32
    %34 = vector.broadcast %cst_8 : f32 to vector<8x128xf32>
    %35 = vector.broadcast %cst_9 : f32 to vector<8x128xf32>
    %36 = arith.select %31, %34, %35 : vector<8x128xi1>, vector<8x128xf32>
    %cst_10 = arith.constant dense<0.000000e+00> : vector<128xf32>
    %37 = vector.multi_reduction <add>, %36, %cst_10 [0] : vector<8x128xf32> to vector<128xf32>
    %38 = vector.shape_cast %37 : vector<128xf32> to vector<1x128xf32>
    %cst_11 = arith.constant 0.000000e+00 : f32
    %39 = vector.broadcast %cst_11 : f32 to vector<8x128xf32>
    %40 = arith.select %31, %29, %39 : vector<8x128xi1>, vector<8x128xf32>
    %cst_12 = arith.constant dense<0.000000e+00> : vector<128xf32>
    %41 = vector.multi_reduction <add>, %40, %cst_12 [0] : vector<8x128xf32> to vector<128xf32>
    %42 = vector.shape_cast %41 : vector<128xf32> to vector<1x128xf32>
    %cst_13 = arith.constant 1.000000e+00 : f32
    %cst_14 = arith.constant 0.000000e+00 : f32
    %43 = vector.broadcast %cst_13 : f32 to vector<8x128xf32>
    %44 = vector.broadcast %cst_14 : f32 to vector<8x128xf32>
    %45 = arith.select %33, %43, %44 : vector<8x128xi1>, vector<8x128xf32>
    %cst_15 = arith.constant dense<0.000000e+00> : vector<128xf32>
    %46 = vector.multi_reduction <add>, %45, %cst_15 [0] : vector<8x128xf32> to vector<128xf32>
    %47 = vector.shape_cast %46 : vector<128xf32> to vector<1x128xf32>
    %48 = arith.andi %31, %33 : vector<8x128xi1>
    %cst_16 = arith.constant 1.000000e+00 : f32
    %cst_17 = arith.constant 0.000000e+00 : f32
    %49 = vector.broadcast %cst_16 : f32 to vector<8x128xf32>
    %50 = vector.broadcast %cst_17 : f32 to vector<8x128xf32>
    %51 = arith.select %48, %49, %50 : vector<8x128xi1>, vector<8x128xf32>
    %cst_18 = arith.constant dense<0.000000e+00> : vector<128xf32>
    %52 = vector.multi_reduction <add>, %51, %cst_18 [0] : vector<8x128xf32> to vector<128xf32>
    %53 = vector.shape_cast %52 : vector<128xf32> to vector<1x128xf32>
    %c1_i32_19 = arith.constant 1 : i32
    %54 = vector.broadcast %c1_i32_19 : i32 to vector<8x128xi32>
    %55 = arith.cmpi eq, %19, %54 : vector<8x128xi32>
    %c1_i32_20 = arith.constant 1 : i32
    %56 = vector.broadcast %c1_i32_20 : i32 to vector<8x128xi32>
    %57 = arith.cmpi eq, %27, %56 : vector<8x128xi32>
    %cst_21 = arith.constant 1.000000e+00 : f32
    %cst_22 = arith.constant 0.000000e+00 : f32
    %58 = vector.broadcast %cst_21 : f32 to vector<8x128xf32>
    %59 = vector.broadcast %cst_22 : f32 to vector<8x128xf32>
    %60 = arith.select %55, %58, %59 : vector<8x128xi1>, vector<8x128xf32>
    %cst_23 = arith.constant dense<0.000000e+00> : vector<128xf32>
    %61 = vector.multi_reduction <add>, %60, %cst_23 [0] : vector<8x128xf32> to vector<128xf32>
    %62 = vector.shape_cast %61 : vector<128xf32> to vector<1x128xf32>
    %cst_24 = arith.constant 0.000000e+00 : f32
    %63 = vector.broadcast %cst_24 : f32 to vector<8x128xf32>
    %64 = arith.select %55, %29, %63 : vector<8x128xi1>, vector<8x128xf32>
    %cst_25 = arith.constant dense<0.000000e+00> : vector<128xf32>
    %65 = vector.multi_reduction <add>, %64, %cst_25 [0] : vector<8x128xf32> to vector<128xf32>
    %66 = vector.shape_cast %65 : vector<128xf32> to vector<1x128xf32>
    %cst_26 = arith.constant 1.000000e+00 : f32
    %cst_27 = arith.constant 0.000000e+00 : f32
    %67 = vector.broadcast %cst_26 : f32 to vector<8x128xf32>
    %68 = vector.broadcast %cst_27 : f32 to vector<8x128xf32>
    %69 = arith.select %57, %67, %68 : vector<8x128xi1>, vector<8x128xf32>
    %cst_28 = arith.constant dense<0.000000e+00> : vector<128xf32>
    %70 = vector.multi_reduction <add>, %69, %cst_28 [0] : vector<8x128xf32> to vector<128xf32>
    %71 = vector.shape_cast %70 : vector<128xf32> to vector<1x128xf32>
    %72 = arith.andi %55, %57 : vector<8x128xi1>
    %cst_29 = arith.constant 1.000000e+00 : f32
    %cst_30 = arith.constant 0.000000e+00 : f32
    %73 = vector.broadcast %cst_29 : f32 to vector<8x128xf32>
    %74 = vector.broadcast %cst_30 : f32 to vector<8x128xf32>
    %75 = arith.select %72, %73, %74 : vector<8x128xi1>, vector<8x128xf32>
    %cst_31 = arith.constant dense<0.000000e+00> : vector<128xf32>
    %76 = vector.multi_reduction <add>, %75, %cst_31 [0] : vector<8x128xf32> to vector<128xf32>
    %77 = vector.shape_cast %76 : vector<128xf32> to vector<1x128xf32>
    %c2_i32 = arith.constant 2 : i32
    %78 = vector.broadcast %c2_i32 : i32 to vector<8x128xi32>
    %79 = arith.cmpi eq, %19, %78 : vector<8x128xi32>
    %c2_i32_32 = arith.constant 2 : i32
    %80 = vector.broadcast %c2_i32_32 : i32 to vector<8x128xi32>
    %81 = arith.cmpi eq, %27, %80 : vector<8x128xi32>
    %cst_33 = arith.constant 1.000000e+00 : f32
    %cst_34 = arith.constant 0.000000e+00 : f32
    %82 = vector.broadcast %cst_33 : f32 to vector<8x128xf32>
    %83 = vector.broadcast %cst_34 : f32 to vector<8x128xf32>
    %84 = arith.select %79, %82, %83 : vector<8x128xi1>, vector<8x128xf32>
    %cst_35 = arith.constant dense<0.000000e+00> : vector<128xf32>
    %85 = vector.multi_reduction <add>, %84, %cst_35 [0] : vector<8x128xf32> to vector<128xf32>
    %86 = vector.shape_cast %85 : vector<128xf32> to vector<1x128xf32>
    %cst_36 = arith.constant 0.000000e+00 : f32
    %87 = vector.broadcast %cst_36 : f32 to vector<8x128xf32>
    %88 = arith.select %79, %29, %87 : vector<8x128xi1>, vector<8x128xf32>
    %cst_37 = arith.constant dense<0.000000e+00> : vector<128xf32>
    %89 = vector.multi_reduction <add>, %88, %cst_37 [0] : vector<8x128xf32> to vector<128xf32>
    %90 = vector.shape_cast %89 : vector<128xf32> to vector<1x128xf32>
    %cst_38 = arith.constant 1.000000e+00 : f32
    %cst_39 = arith.constant 0.000000e+00 : f32
    %91 = vector.broadcast %cst_38 : f32 to vector<8x128xf32>
    %92 = vector.broadcast %cst_39 : f32 to vector<8x128xf32>
    %93 = arith.select %81, %91, %92 : vector<8x128xi1>, vector<8x128xf32>
    %cst_40 = arith.constant dense<0.000000e+00> : vector<128xf32>
    %94 = vector.multi_reduction <add>, %93, %cst_40 [0] : vector<8x128xf32> to vector<128xf32>
    %95 = vector.shape_cast %94 : vector<128xf32> to vector<1x128xf32>
    %96 = arith.andi %79, %81 : vector<8x128xi1>
    %cst_41 = arith.constant 1.000000e+00 : f32
    %cst_42 = arith.constant 0.000000e+00 : f32
    %97 = vector.broadcast %cst_41 : f32 to vector<8x128xf32>
    %98 = vector.broadcast %cst_42 : f32 to vector<8x128xf32>
    %99 = arith.select %96, %97, %98 : vector<8x128xi1>, vector<8x128xf32>
    %cst_43 = arith.constant dense<0.000000e+00> : vector<128xf32>
    %100 = vector.multi_reduction <add>, %99, %cst_43 [0] : vector<8x128xf32> to vector<128xf32>
    %101 = vector.shape_cast %100 : vector<128xf32> to vector<1x128xf32>
    %c3_i32 = arith.constant 3 : i32
    %102 = vector.broadcast %c3_i32 : i32 to vector<8x128xi32>
    %103 = arith.cmpi eq, %19, %102 : vector<8x128xi32>
    %c3_i32_44 = arith.constant 3 : i32
    %104 = vector.broadcast %c3_i32_44 : i32 to vector<8x128xi32>
    %105 = arith.cmpi eq, %27, %104 : vector<8x128xi32>
    %cst_45 = arith.constant 1.000000e+00 : f32
    %cst_46 = arith.constant 0.000000e+00 : f32
    %106 = vector.broadcast %cst_45 : f32 to vector<8x128xf32>
    %107 = vector.broadcast %cst_46 : f32 to vector<8x128xf32>
    %108 = arith.select %103, %106, %107 : vector<8x128xi1>, vector<8x128xf32>
    %cst_47 = arith.constant dense<0.000000e+00> : vector<128xf32>
    %109 = vector.multi_reduction <add>, %108, %cst_47 [0] : vector<8x128xf32> to vector<128xf32>
    %110 = vector.shape_cast %109 : vector<128xf32> to vector<1x128xf32>
    %cst_48 = arith.constant 0.000000e+00 : f32
    %111 = vector.broadcast %cst_48 : f32 to vector<8x128xf32>
    %112 = arith.select %103, %29, %111 : vector<8x128xi1>, vector<8x128xf32>
    %cst_49 = arith.constant dense<0.000000e+00> : vector<128xf32>
    %113 = vector.multi_reduction <add>, %112, %cst_49 [0] : vector<8x128xf32> to vector<128xf32>
    %114 = vector.shape_cast %113 : vector<128xf32> to vector<1x128xf32>
    %cst_50 = arith.constant 1.000000e+00 : f32
    %cst_51 = arith.constant 0.000000e+00 : f32
    %115 = vector.broadcast %cst_50 : f32 to vector<8x128xf32>
    %116 = vector.broadcast %cst_51 : f32 to vector<8x128xf32>
    %117 = arith.select %105, %115, %116 : vector<8x128xi1>, vector<8x128xf32>
    %cst_52 = arith.constant dense<0.000000e+00> : vector<128xf32>
    %118 = vector.multi_reduction <add>, %117, %cst_52 [0] : vector<8x128xf32> to vector<128xf32>
    %119 = vector.shape_cast %118 : vector<128xf32> to vector<1x128xf32>
    %120 = arith.andi %103, %105 : vector<8x128xi1>
    %cst_53 = arith.constant 1.000000e+00 : f32
    %cst_54 = arith.constant 0.000000e+00 : f32
    %121 = vector.broadcast %cst_53 : f32 to vector<8x128xf32>
    %122 = vector.broadcast %cst_54 : f32 to vector<8x128xf32>
    %123 = arith.select %120, %121, %122 : vector<8x128xi1>, vector<8x128xf32>
    %cst_55 = arith.constant dense<0.000000e+00> : vector<128xf32>
    %124 = vector.multi_reduction <add>, %123, %cst_55 [0] : vector<8x128xf32> to vector<128xf32>
    %125 = vector.shape_cast %124 : vector<128xf32> to vector<1x128xf32>
    %126 = tpu.concatenate %38, %62, %86, %110, %42, %66, %90, %114, %47, %71, %95, %119, %53, %77, %101, %125 in 0 : vector<1x128xf32>, vector<1x128xf32>, vector<1x128xf32>, vector<1x128xf32>, vector<1x128xf32>, vector<1x128xf32>, vector<1x128xf32>, vector<1x128xf32>, vector<1x128xf32>, vector<1x128xf32>, vector<1x128xf32>, vector<1x128xf32>, vector<1x128xf32>, vector<1x128xf32>, vector<1x128xf32>, vector<1x128xf32> -> vector<16x128xf32>
    %c0_56 = arith.constant 0 : index
    %c0_57 = arith.constant 0 : index
    %c0_58 = arith.constant 0 : index
    %127 = vector.load %arg4[%c0_56, %c0_57, %c0_58] : memref<1x16x128xf32, #tpu.memory_space<vmem>>, vector<1x16x128xf32>
    %128 = vector.shape_cast %126 : vector<16x128xf32> to vector<1x16x128xf32>
    %129 = arith.addf %127, %128 : vector<1x16x128xf32>
    %c0_59 = arith.constant 0 : index
    %c0_60 = arith.constant 0 : index
    %c0_61 = arith.constant 0 : index
    %130 = vector.load %arg4[%c0_59, %c0_60, %c0_61] : memref<1x16x128xf32, #tpu.memory_space<vmem>>, vector<1x16x128xf32>
    tpu.vector_store %arg4[%c0_59, %c0_60, %c0_61], %129 {strides = array<i32>} : memref<1x16x128xf32, #tpu.memory_space<vmem>>, vector<1x16x128xf32>,
    return
  }
  func.func @transform_0(%arg0: i32, %arg1: i32) -> (i32, i32) {
    %c1_i32 = arith.constant 1 : i32
    %0 = arith.muli %arg0, %c1_i32 : i32
    %1 = arith.addi %0, %arg1 : i32
    %c0_i32 = arith.constant 0 : i32
    %2 = arith.minsi %1, %c0_i32 : i32
    %c0_i32_0 = arith.constant 0 : i32
    %c0_i32_1 = arith.constant 0 : i32
    return %2, %c0_i32_0 : i32, i32
  }
  func.func @transform_1(%arg0: i32, %arg1: i32) -> (i32, i32) {
    %c1_i32 = arith.constant 1 : i32
    %0 = arith.muli %arg0, %c1_i32 : i32
    %1 = arith.addi %0, %arg1 : i32
    %c0_i32 = arith.constant 0 : i32
    %2 = arith.minsi %1, %c0_i32 : i32
    %c0_i32_0 = arith.constant 0 : i32
    %c0_i32_1 = arith.constant 0 : i32
    return %2, %c0_i32_0 : i32, i32
  }
  func.func @transform_2(%arg0: i32, %arg1: i32) -> (i32, i32, i32) {
    %c0_i32 = arith.constant 0 : i32
    %c0_i32_0 = arith.constant 0 : i32
    %c0_i32_1 = arith.constant 0 : i32
    return %arg0, %c0_i32, %c0_i32_0 : i32, i32, i32
  }
}

</mosaic_0001>

<llo_original>
// kernel: tpu_custom_call.1
$region0: #{tpu_custom_call.1}
  #allocation0 [shape = 'u32[]', space=smem, size = 0x4, offset = 0x4, fixed_abs, tag = 'smem constant byte address 0x4 - core index']
  #allocation1 [shape = 'u32[144,128]{1,0:T(1,128)}', space=vmem, size = 0x12000, scoped, tag = 'internal scratch']
  %s0 = inlined_call_operand.hbm [shape: f32[8,128], index: 0, kind: input, shape index: {}]
  %s1 = inlined_call_operand.hbm [shape: f32[8,128], index: 1, kind: input, shape index: {}]
  %s2 = inlined_call_operand.hbm [shape: f32[1,16,128], index: 2, kind: output, shape index: {}]
  %s3 = sld [smem:[#allocation0]]
  $region30: #{tpu_custom_call.1} parent=0
    _
  %s5 = ssub.s32 1, %s3
  %s6 = scalar_select 0, %s5, %s3
  $region1: #{tpu_custom_call.1} parent=0
    #allocation2 [shape = 'u8[4096]{0}', space=vmem, size = 0x1000, scoped, tag = 'input window, operand 0, single buffered']
    #allocation3 [shape = 's32[1]{0}', space=sflag, size = 0x4, scoped, tag = 'scoped memory for tpu_custom_call.1']
    #allocation4 [shape = 's32[1]{0}', space=sflag, size = 0x4, scoped, tag = 'scoped memory for tpu_custom_call.1']
    #allocation5 [shape = 'u8[4096]{0}', space=vmem, size = 0x1000, scoped, tag = 'input window, operand 1, single buffered']
    #allocation6 [shape = 's32[1]{0}', space=sflag, size = 0x4, scoped, tag = 'scoped memory for tpu_custom_call.1']
    #allocation7 [shape = 'u8[8192]{0}', space=vmem, size = 0x2000, scoped, tag = 'output window, operand 0, single buffered']
    %7 = vsyncpa [#allocation3], 0
    %8 = vsyncpa [#allocation6], 0
    %9 = vsyncpa [#allocation4], 0
    // Predicated region
    $region2: #{tpu_custom_call.1} parent=1 // pred_check
      _
    $region3: #{tpu_custom_call.1} parent=1 // pred_check_branch
      %11 = sbr.rel (0) target = $region5
    $region4: #{tpu_custom_call.1} parent=1 // pred_region
      %s12 = sadd.s32 0, 0
      %p13 = scmp.lt.s32.totalorder %s12, 0
      %s14 = scalar_select %p13, %s12, 0
      %s16 = ssub.s32 128, 128
      %17 = vsyncadd [#allocation3], %s16
      %s18 = smul.addr %s14, 128
      %s19 = scalar_lea.hbm %s0, %s18
      %s21 = sshll.u32 [#allocation2], 4
      %s22 = int_to_ptr.vmem [resolvable:$true] %s21
      %24 = dma.hbm_to_vmem [thread:$0]  %s19, 128, %s22, [#allocation3]
    $region5: #{tpu_custom_call.1} parent=1 // pred_fallthru
      _
    // Predicated region
    $region6: #{tpu_custom_call.1} parent=1 // pred_check
      _
    $region7: #{tpu_custom_call.1} parent=1 // pred_check_branch
      %26 = sbr.rel (0) target = $region9
    $region8: #{tpu_custom_call.1} parent=1 // pred_region
      %s27 = sadd.s32 0, 0
      %p28 = scmp.lt.s32.totalorder %s27, 0
      %s29 = scalar_select %p28, %s27, 0
      %s31 = ssub.s32 128, 128
      %32 = vsyncadd [#allocation6], %s31
      %s33 = smul.addr %s29, 128
      %s34 = scalar_lea.hbm %s1, %s33
      %s36 = sshll.u32 [#allocation5], 4
      %s37 = int_to_ptr.vmem [resolvable:$true] %s36
      %39 = dma.hbm_to_vmem [thread:$0]  %s34, 128, %s37, [#allocation6]
    $region9: #{tpu_custom_call.1} parent=1 // pred_fallthru
      _
    // Predicated region
    $region10: #{tpu_custom_call.1} parent=1 // pred_check
      _
    $region11: #{tpu_custom_call.1} parent=1 // pred_check_branch
      %41 = sbr.rel (0) target = $region13
    $region12: #{tpu_custom_call.1} parent=1 // pred_region
      %42 = dma.done [#allocation3], 128
    $region13: #{tpu_custom_call.1} parent=1 // pred_fallthru
      _
    // Predicated region
    $region14: #{tpu_custom_call.1} parent=1 // pred_check
      _
    $region15: #{tpu_custom_call.1} parent=1 // pred_check_branch
      %44 = sbr.rel (0) target = $region17
    $region16: #{tpu_custom_call.1} parent=1 // pred_region
      %45 = dma.done [#allocation6], 128
    $region17: #{tpu_custom_call.1} parent=1 // pred_fallthru
      _
    %s46 = sadd.s32 0, 0
    %p47 = scmp.lt.s32.totalorder %s46, 0
    %s48 = scalar_select %p47, %s46, 0
    %s49 = sadd.s32 0, 0
    %p50 = scmp.lt.s32.totalorder %s49, 0
    %s51 = scalar_select %p50, %s49, 0
    %p52 = scmp.eq.s32.totalorder 0, 0
    // Predicated region
    $region18: #{tpu_custom_call.1} parent=1 // pred_check
      %p53 = pneg %p52
    $region19: #{tpu_custom_call.1} parent=1 // pred_check_branch
      %55 = sbr.rel (%p53) target = $region21
    $region20: #{tpu_custom_call.1} parent=1 // pred_region
      %56 = vst [vmem:[#allocation7] sm:$0xff] 0.0
      %57 = vst [vmem:[#allocation7 + $0x8] sm:$0xff] 0.0
    $region21: #{tpu_custom_call.1} parent=1 // pred_fallthru
      _
    %s58 = sadd.s32 0, 0
    %v59 = vld [vmem:[#allocation2] sm:$0xff]
    %v60 = vld [vmem:[#allocation5] sm:$0xff]
    %v61 = vlaneseq
    %v62 = vshrl.u32 %v61, 7
    %v63 = vlaneseq
    %v64 = vand.u32 %v63, 127
    %s65 = smul.u32 %s58, 8
    %v66 = vstv %s65
    %v67 = vadd.s32 %v66, %v62
    %v68 = vmul.u32 %v67, 128
    %v69 = vadd.s32 %v68, %v64
    %vm70 = vcmp.lt.s32.totalorder %v69, 512
    %v71 = vcvt.f32.s32.to.zero.pseudo %v59
    %v72 = vsel %vm70, %v71, 4294967295
    %v73 = vmax.f32 %v60, 0.0
    %v74 = vmin.f32 %v73, 3.0
    %v75 = vcvt.f32.s32.ties.to.even %v74
    %v76 = vsel %vm70, %v75, 4294967295
    %v77 = vsub.f32 %v59, %v60
    %v78 = vmul.f32 %v77, %v77
    %vm79 = vcmp.eq.s32.totalorder %v72, 0
    %vm80 = vcmp.eq.s32.totalorder %v76, 0
    %v81 = vsel %vm79, 1.0, 0.0
    %v82 = vrot.slane %v81, 4
    %v83 = vadd.f32 %v81, %v82
    %v84 = vrot.slane %v83, 2
    %v85 = vadd.f32 %v83, %v84
    %v86 = vrot.slane %v85, 1
    %v87 = vadd.f32 %v85, %v86
    %v88 = vsel %vm79, %v78, 0.0
    %v89 = vrot.slane %v88, 4
    %v90 = vadd.f32 %v88, %v89
    %v91 = vrot.slane %v90, 2
    %v92 = vadd.f32 %v90, %v91
    %v93 = vrot.slane %v92, 1
    %v94 = vadd.f32 %v92, %v93
    %v95 = vsel %vm80, 1.0, 0.0
    %v96 = vrot.slane %v95, 4
    %v97 = vadd.f32 %v95, %v96
    %v98 = vrot.slane %v97, 2
    %v99 = vadd.f32 %v97, %v98
    %v100 = vrot.slane %v99, 1
    %v101 = vadd.f32 %v99, %v100
    %vm102 = vmand %vm79, %vm80
    %v103 = vsel %vm102, 1.0, 0.0
    %v104 = vrot.slane %v103, 4
    %v105 = vadd.f32 %v103, %v104
    %v106 = vrot.slane %v105, 2
    %v107 = vadd.f32 %v105, %v106
    %v108 = vrot.slane %v107, 1
    %v109 = vadd.f32 %v107, %v108
    %vm110 = vcmp.eq.s32.totalorder %v72, 1
    %vm111 = vcmp.eq.s32.totalorder %v76, 1
    %v112 = vsel %vm110, 1.0, 0.0
    %v113 = vrot.slane %v112, 4
    %v114 = vadd.f32 %v112, %v113
    %v115 = vrot.slane %v114, 2
    %v116 = vadd.f32 %v114, %v115
    %v117 = vrot.slane %v116, 1
    %v118 = vadd.f32 %v116, %v117
    %v119 = vsel %vm110, %v78, 0.0
    %v120 = vrot.slane %v119, 4
    %v121 = vadd.f32 %v119, %v120
    %v122 = vrot.slane %v121, 2
    %v123 = vadd.f32 %v121, %v122
    %v124 = vrot.slane %v123, 1
    %v125 = vadd.f32 %v123, %v124
    %v126 = vsel %vm111, 1.0, 0.0
    %v127 = vrot.slane %v126, 4
    %v128 = vadd.f32 %v126, %v127
    %v129 = vrot.slane %v128, 2
    %v130 = vadd.f32 %v128, %v129
    %v131 = vrot.slane %v130, 1
    %v132 = vadd.f32 %v130, %v131
    %vm133 = vmand %vm110, %vm111
    %v134 = vsel %vm133, 1.0, 0.0
    %v135 = vrot.slane %v134, 4
    %v136 = vadd.f32 %v134, %v135
    %v137 = vrot.slane %v136, 2
    %v138 = vadd.f32 %v136, %v137
    %v139 = vrot.slane %v138, 1
    %v140 = vadd.f32 %v138, %v139
    %vm141 = vcmp.eq.s32.totalorder %v72, 2
    %vm142 = vcmp.eq.s32.totalorder %v76, 2
    %v143 = vsel %vm141, 1.0, 0.0
    %v144 = vrot.slane %v143, 4
    %v145 = vadd.f32 %v143, %v144
    %v146 = vrot.slane %v145, 2
    %v147 = vadd.f32 %v145, %v146
    %v148 = vrot.slane %v147, 1
    %v149 = vadd.f32 %v147, %v148
    %v150 = vsel %vm141, %v78, 0.0
    %v151 = vrot.slane %v150, 4
    %v152 = vadd.f32 %v150, %v151
    %v153 = vrot.slane %v152, 2
    %v154 = vadd.f32 %v152, %v153
    %v155 = vrot.slane %v154, 1
    %v156 = vadd.f32 %v154, %v155
    %v157 = vsel %vm142, 1.0, 0.0
    %v158 = vrot.slane %v157, 4
    %v159 = vadd.f32 %v157, %v158
    %v160 = vrot.slane %v159, 2
    %v161 = vadd.f32 %v159, %v160
    %v162 = vrot.slane %v161, 1
    %v163 = vadd.f32 %v161, %v162
    %vm164 = vmand %vm141, %vm142
    %v165 = vsel %vm164, 1.0, 0.0
    %v166 = vrot.slane %v165, 4
    %v167 = vadd.f32 %v165, %v166
    %v168 = vrot.slane %v167, 2
    %v169 = vadd.f32 %v167, %v168
    %v170 = vrot.slane %v169, 1
    %v171 = vadd.f32 %v169, %v170
    %vm172 = vcmp.eq.s32.totalorder %v72, 3
    %vm173 = vcmp.eq.s32.totalorder %v76, 3
    %v174 = vsel %vm172, 1.0, 0.0
    %v175 = vrot.slane %v174, 4
    %v176 = vadd.f32 %v174, %v175
    %v177 = vrot.slane %v176, 2
    %v178 = vadd.f32 %v176, %v177
    %v179 = vrot.slane %v178, 1
    %v180 = vadd.f32 %v178, %v179
    %v181 = vsel %vm172, %v78, 0.0
    %v182 = vrot.slane %v181, 4
    %v183 = vadd.f32 %v181, %v182
    %v184 = vrot.slane %v183, 2
    %v185 = vadd.f32 %v183, %v184
    %v186 = vrot.slane %v185, 1
    %v187 = vadd.f32 %v185, %v186
    %v188 = vsel %vm173, 1.0, 0.0
    %v189 = vrot.slane %v188, 4
    %v190 = vadd.f32 %v188, %v189
    %v191 = vrot.slane %v190, 2
    %v192 = vadd.f32 %v190, %v191
    %v193 = vrot.slane %v192, 1
    %v194 = vadd.f32 %v192, %v193
    %vm195 = vmand %vm172, %vm173
    %v196 = vsel %vm195, 1.0, 0.0
    %v197 = vrot.slane %v196, 4
    %v198 = vadd.f32 %v196, %v197
    %v199 = vrot.slane %v198, 2
    %v200 = vadd.f32 %v198, %v199
    %v201 = vrot.slane %v200, 1
    %v202 = vadd.f32 %v200, %v201
    %vm203 = vcmask 1040384
    %v204 = vsel %vm203, %v87, %v118
    %vm205 = vcmask 1041408
    %v206 = vsel %vm205, %v204, %v149
    %vm207 = vcmask 1042432
    %v208 = vsel %vm207, %v206, %v180
    %vm209 = vcmask 1043456
    %v210 = vsel %vm209, %v208, %v94
    %vm211 = vcmask 1044480
    %v212 = vsel %vm211, %v210, %v125
    %vm213 = vcmask 1045504
    %v214 = vsel %vm213, %v212, %v156
    %vm215 = vcmask 1046528
    %v216 = vsel %vm215, %v214, %v187
    %v217 = vsel %vm203, %v101, %v132
    %v218 = vsel %vm205, %v217, %v163
    %v219 = vsel %vm207, %v218, %v194
    %v220 = vsel %vm209, %v219, %v109
    %v221 = vsel %vm211, %v220, %v140
    %v222 = vsel %vm213, %v221, %v171
    %v223 = vsel %vm215, %v222, %v202
    %v224 = vld [vmem:[#allocation7] sm:$0xff]
    %v225 = vld [vmem:[#allocation7 + $0x8] sm:$0xff]
    %v226 = vadd.f32 %v224, %v216
    %v227 = vadd.f32 %v225, %v223
    %228 = vst [vmem:[#allocation7] sm:$0xff] %v226
    %229 = vst [vmem:[#allocation7 + $0x8] sm:$0xff] %v227
    // Predicated region
    $region22: #{tpu_custom_call.1} parent=1 // pred_check
      _
    $region23: #{tpu_custom_call.1} parent=1 // pred_check_branch
      %231 = sbr.rel (0) target = $region25
    $region24: #{tpu_custom_call.1} parent=1 // pred_region
      %s233 = ssub.s32 256, 256
      %234 = vsyncadd [#allocation4], %s233
      %s235 = sshll.u32 [#allocation7], 4
      %s236 = int_to_ptr.vmem [resolvable:$true] %s235
      %241 = dma.vmem_to_hbm [thread:$0]  %s236, 256, %s2, [#allocation4], 128, 128, 8
    $region25: #{tpu_custom_call.1} parent=1 // pred_fallthru
      _
    // Predicated region
    $region26: #{tpu_custom_call.1} parent=1 // pred_check
      _
    $region27: #{tpu_custom_call.1} parent=1 // pred_check_branch
      %243 = sbr.rel (0) target = $region29
    $region28: #{tpu_custom_call.1} parent=1 // pred_region
      %244 = dma.done [#allocation4], 256
    $region29: #{tpu_custom_call.1} parent=1 // pred_fallthru
      _
    %245 = vsyncpa [#allocation3], 1
    %246 = vsyncpa [#allocation6], 1
    %247 = vsyncpa [#allocation4], 1

</llo_original>
